<compile_context>
chip_gen: v7x
topology: tpu7x:2x2x1
jax: 0.10.0
libtpu: 0.0.40
codegen_flags: <defaults>
</compile_context>

<pallas_src>
import jax
import jax.numpy as jnp
from jax.experimental import pallas as pl
from jax.experimental.pallas import tpu as pltpu


def _cdiv(a, b):
    return (a + b - 1) // b


def _round_up(x, m):
    return _cdiv(x, m) * m


def _linear_kernel_acc(x_ref, w_ref, b_ref, o_ref, acc_ref):
    # grid = (rows, cols_out, k_reduction); K is the trailing "arbitrary" axis.
    k = pl.program_id(2)

    @pl.when(k == 0)
    def _():
        # Fold the bias into the accumulator init: the finalize branch is then a
        # pure cast + store (no extra VPU add / acc read on the last K step).
        acc_ref[...] = jnp.broadcast_to(
            b_ref[...].astype(jnp.float32), acc_ref.shape
        )

    acc_ref[...] += jnp.dot(
        x_ref[...], w_ref[...], preferred_element_type=jnp.float32
    )

    @pl.when(k == pl.num_programs(2) - 1)
    def _():
        o_ref[...] = acc_ref[...].astype(o_ref.dtype)


def _linear_kernel_single(x_ref, w_ref, b_ref, o_ref):
    # Single K step: no accumulator scratch, write dot + bias straight out.
    acc = jnp.dot(x_ref[...], w_ref[...], preferred_element_type=jnp.float32)
    o_ref[...] = (acc + b_ref[...].astype(jnp.float32)).astype(o_ref.dtype)


def pallas_linear(x2d, w, b, *, tm=512, tn=512, tk=1024,
                  compute_dtype=None, min_flops_for_pallas=4_000_000):
    """x2d: (M, d_in), w: (d_in, d_out), b: (d_out,) or (1, d_out) -> (M, d_out)."""
    M, d_in = x2d.shape
    d_out = w.shape[1]
    out_dtype = x2d.dtype
    b2d = b.reshape(1, d_out)

    # Tiny problems: padding + ~0.35 us/step pipeline overhead dominate; XLA's
    # fused matmul wins outright. Fall back.
    if 2 * M * d_in * d_out < min_flops_for_pallas:
        acc = jnp.dot(x2d, w, preferred_element_type=jnp.float32)
        return (acc + b2d.astype(jnp.float32)).astype(out_dtype)

    # Optionally feed the MXU bf16 (its peak on v5e/v6e/v7x) while keeping the
    # f32 accumulator and f32 output dtype.
    if compute_dtype is not None and jnp.dtype(compute_dtype) != x2d.dtype:
        x2d = x2d.astype(compute_dtype)
        w = w.astype(compute_dtype)
    in_dtype = x2d.dtype
    in_bytes = jnp.dtype(in_dtype).itemsize
    out_bytes = jnp.dtype(out_dtype).itemsize
    b_bytes = jnp.dtype(b2d.dtype).itemsize

    # dtype-native sublane packing: 8 rows f32, 16 bf16, 32 int8/fp8.
    sublane = max(8, 32 // in_bytes)

    # Balanced tiles (minimise edge waste) with (sublane, 128) alignment.
    nm = _cdiv(M, tm)
    tm = _round_up(_cdiv(M, nm), sublane)
    nn = _cdiv(d_out, tn)
    tn = _round_up(_cdiv(d_out, nn), 128)
    nk = _cdiv(d_in, tk)
    tk = _round_up(_cdiv(d_in, nk), 128)

    gm = _cdiv(M, tm)
    gn = _cdiv(d_out, tn)

    # v7x megacore: make sure there are >= 2 parallel tiles when the problem
    # allows it (otherwise one TensorCore idles).
    if gm * gn < 2 and M >= 2 * sublane:
        tm = _round_up(_cdiv(M, 2), sublane)
        gm = _cdiv(M, tm)

    # Only K needs zero padding for correctness (garbage in OOB M/N edge blocks
    # only reaches output rows/cols that Pallas masks off on store).
    Kp = nk * tk
    xp = x2d if Kp == d_in else jnp.pad(x2d, ((0, 0), (0, Kp - d_in)))
    wp = w if Kp == d_in else jnp.pad(w, ((0, Kp - d_in), (0, 0)))

    cost = pl.CostEstimate(
        flops=2 * M * d_in * d_out,
        transcendentals=0,
        bytes_accessed=int(
            gn * M * Kp * in_bytes            # x is re-read once per N tile
            + gm * Kp * d_out * in_bytes      # w is re-read once per M tile
            + d_out * b_bytes
            + M * d_out * out_bytes           # output write
        ),
    )

    # Double-buffered window footprint -> explicit VMEM limit.
    window_bytes = 2 * (tm * tk * in_bytes + tk * tn * in_bytes
                        + tm * tn * out_bytes + tn * b_bytes)
    acc_bytes = tm * tn * 4 if nk > 1 else 0
    vmem_limit = int(min(max(2 * (window_bytes + acc_bytes), 32 << 20), 48 << 20))

    if nk == 1:
        grid_spec = pltpu.PrefetchScalarGridSpec(
            num_scalar_prefetch=0,
            grid=(gm, gn),
            in_specs=[
                pl.BlockSpec((tm, tk), lambda i, j: (i, 0)),   # x row tile
                pl.BlockSpec((tk, tn), lambda i, j: (0, j)),   # weight N tile
                pl.BlockSpec((1, tn), lambda i, j: (0, j)),    # bias N tile
            ],
            out_specs=pl.BlockSpec((tm, tn), lambda i, j: (i, j)),
            scratch_shapes=[],
        )
        kernel = _linear_kernel_single
        dims = ("parallel", "parallel")
    else:
        grid_spec = pltpu.PrefetchScalarGridSpec(
            num_scalar_prefetch=0,
            grid=(gm, gn, nk),
            in_specs=[
                pl.BlockSpec((tm, tk), lambda i, j, k: (i, k)),  # x row/K tile
                pl.BlockSpec((tk, tn), lambda i, j, k: (k, j)),  # weight K/N tile
                pl.BlockSpec((1, tn), lambda i, j, k: (0, j)),   # bias N tile
            ],
            out_specs=pl.BlockSpec((tm, tn), lambda i, j, k: (i, j)),
            scratch_shapes=[pltpu.VMEM((tm, tn), jnp.float32)],
        )
        kernel = _linear_kernel_acc
        dims = ("parallel", "parallel", "arbitrary")

    return pl.pallas_call(
        kernel,
        out_shape=jax.ShapeDtypeStruct((M, d_out), out_dtype),
        grid_spec=grid_spec,
        compiler_params=pltpu.CompilerParams(
            dimension_semantics=dims,
            vmem_limit_bytes=vmem_limit,
        ),
        cost_estimate=cost,
    )(xp, wp, b2d)


def time_distributed_linear(x, w, b, **linear_kwargs):
    """TimeDistributed(Linear) forward.

    x: (batch, time, d_in)  (the first two dims are merged, whatever they are)
    returns: (batch, time, d_out)
    """
    # TODO(synk): generic wrapping of arbitrary modules / kwargs pass_through is
    # python-level plumbing in the original; only the Linear hot path is a kernel.
    if x.ndim <= 2:
        raise RuntimeError(f"No dimension to distribute: {x.shape}")
    # _reshape_tensor: squash first two dims -> (-1, rest)
    squashed = x.reshape((-1,) + x.shape[2:])
    # inner module (Linear) on the squashed batch; hot path in Pallas
    reshaped_output = pallas_linear(squashed, w, b, **linear_kwargs)
    # split back: some_input.size()[:2] + reshaped_output.size()[1:]
    new_size = x.shape[:2] + reshaped_output.shape[1:]
    return reshaped_output.reshape(new_size)


if __name__ == "__main__":
    key = jax.random.PRNGKey(0)
    kx, kw, kb, kx2, kw2, kb2 = jax.random.split(key, 6)

    # Case 1: tiny shape -> routed through the jnp fallback (TimeDistributed glue).
    batch, time_steps, d_in, d_out = 2, 8, 32, 64
    x = jax.random.normal(kx, (batch, time_steps, d_in), dtype=jnp.float32)
    w = jax.random.normal(kw, (d_in, d_out), dtype=jnp.float32) * 0.1
    b = jax.random.normal(kb, (d_out,), dtype=jnp.float32) * 0.1
    out = jax.block_until_ready(time_distributed_linear(x, w, b))
    ref = (x.reshape(-1, d_in) @ w + b[None, :]).reshape(batch, time_steps, d_out)
    assert out.shape == (batch, time_steps, d_out)
    assert jnp.allclose(out, ref, atol=1e-4, rtol=1e-4)

    # Case 2: big enough to take the Pallas path (f32 compute, single-K kernel).
    batch2, time2, d_in2, d_out2 = 2, 128, 256, 256
    x2 = jax.random.normal(kx2, (batch2, time2, d_in2), dtype=jnp.float32)
    w2 = jax.random.normal(kw2, (d_in2, d_out2), dtype=jnp.float32) * 0.05
    b2 = jax.random.normal(kb2, (d_out2,), dtype=jnp.float32) * 0.1
    out2 = jax.block_until_ready(time_distributed_linear(x2, w2, b2))
    ref2 = (x2.reshape(-1, d_in2) @ w2 + b2[None, :]).reshape(
        batch2, time2, d_out2)
    assert out2.shape == ref2.shape
    assert jnp.allclose(out2, ref2, atol=5e-2, rtol=5e-2)

    # Case 3: bf16 MXU feed + forced K tiling -> exercises the accumulator kernel.
    out3 = jax.block_until_ready(
        time_distributed_linear(x2, w2, b2, compute_dtype=jnp.bfloat16, tk=128))
    assert out3.shape == ref2.shape
    assert jnp.allclose(out3, ref2, atol=1e-1, rtol=1e-1)

    print("KERNEL_OK")
</pallas_src>

<mosaic_0001>
module attributes {stable_mosaic.version = 11 : i64} {
  func.func @_linear_kernel_single(%arg0: i32, %arg1: i32, %arg2: memref<128x256xf32, #tpu.memory_space<vmem>>, %arg3: memref<256x256xf32, #tpu.memory_space<vmem>>, %arg4: memref<1x256xf32, #tpu.memory_space<vmem>>, %arg5: memref<128x256xf32, #tpu.memory_space<vmem>>) attributes {dimension_semantics = [#tpu.dimension_semantics<parallel>, #tpu.dimension_semantics<parallel>], iteration_bounds = array<i64: 2, 1>, scalar_prefetch = 0 : i64, scratch_operands = 0 : i64, tpu.core_type = #tpu.core_type<tc>, window_params = [{transform_indices = @transform_0, window_bounds = array<i64: 128, 256>}, {transform_indices = @transform_1, window_bounds = array<i64: 256, 256>}, {transform_indices = @transform_2, window_bounds = array<i64: 1, 256>}, {transform_indices = @transform_3, window_bounds = array<i64: 128, 256>}]} {
    %c0 = arith.constant 0 : index
    %c0_0 = arith.constant 0 : index
    %0 = vector.load %arg2[%c0, %c0_0] : memref<128x256xf32, #tpu.memory_space<vmem>>, vector<128x256xf32>
    %c0_1 = arith.constant 0 : index
    %c0_2 = arith.constant 0 : index
    %1 = vector.load %arg3[%c0_1, %c0_2] : memref<256x256xf32, #tpu.memory_space<vmem>>, vector<256x256xf32>
    %cst = arith.constant dense<0.000000e+00> : vector<128x256xf32>
    %2 = tpu.matmul %0, %1, %cst {dimension_numbers = #tpu.dot_dimension_numbers<[1], [0], [0], [1], [0, 0, 1, 1], [], []>} : vector<128x256xf32>, vector<256x256xf32>, vector<128x256xf32> -> vector<128x256xf32>
    %c0_3 = arith.constant 0 : index
    %c0_4 = arith.constant 0 : index
    %3 = vector.load %arg4[%c0_3, %c0_4] : memref<1x256xf32, #tpu.memory_space<vmem>>, vector<1x256xf32>
    %4 = vector.broadcast %3 : vector<1x256xf32> to vector<128x256xf32>
    %5 = arith.addf %2, %4 : vector<128x256xf32>
    %c0_5 = arith.constant 0 : index
    %c0_6 = arith.constant 0 : index
    %6 = vector.load %arg5[%c0_5, %c0_6] : memref<128x256xf32, #tpu.memory_space<vmem>>, vector<128x256xf32>
    tpu.vector_store %arg5[%c0_5, %c0_6], %5 {strides = array<i32>} : memref<128x256xf32, #tpu.memory_space<vmem>>, vector<128x256xf32>,
    return
  }
  func.func @transform_0(%arg0: i32, %arg1: i32) -> (i32, i32) {
    %c0_i32 = arith.constant 0 : i32
    %c0_i32_0 = arith.constant 0 : i32
    return %arg0, %c0_i32 : i32, i32
  }
  func.func @transform_1(%arg0: i32, %arg1: i32) -> (i32, i32) {
    %c0_i32 = arith.constant 0 : i32
    %c0_i32_0 = arith.constant 0 : i32
    return %c0_i32, %arg1 : i32, i32
  }
  func.func @transform_2(%arg0: i32, %arg1: i32) -> (i32, i32) {
    %c0_i32 = arith.constant 0 : i32
    %c0_i32_0 = arith.constant 0 : i32
    return %c0_i32, %arg1 : i32, i32
  }
  func.func @transform_3(%arg0: i32, %arg1: i32) -> (i32, i32) {
    %c0_i32 = arith.constant 0 : i32
    return %arg0, %arg1 : i32, i32
  }
}

</mosaic_0001>

<llo_original>
// kernel: tpu_custom_call.1
$region0: #{tpu_custom_call.1}
  #allocation0 [shape = 'u32[]', space=smem, size = 0x4, offset = 0x4, fixed_abs, tag = 'smem constant byte address 0x4 - core index']
  #allocation1 [shape = 'u32[144,128]{1,0:T(1,128)}', space=vmem, size = 0x12000, scoped, tag = 'internal scratch']
  %s0 = inlined_call_operand.hbm [shape: f32[256,256], index: 0, kind: input, shape index: {}]
  %s1 = inlined_call_operand.hbm [shape: f32[256,256], index: 1, kind: input, shape index: {}]
  %s2 = inlined_call_operand.vmem [shape: f32[1,256], index: 2, kind: input, shape index: {}]
  %s3 = inlined_call_operand.hbm [shape: f32[256,256], index: 3, kind: output, shape index: {}]
  %s4 = sld [smem:[#allocation0]]
  $region53: #{tpu_custom_call.1} parent=0
    _
  %s6 = ssub.s32 1, %s4
  %s7 = scalar_select 0, %s6, %s4
  $region1: #{tpu_custom_call.1} parent=0
    #allocation2 [shape = 'u8[262144]{0}', space=vmem, size = 0x40000, scoped, tag = 'input window, operand 0']
    #allocation3 [shape = 's32[2]{0}', space=sflag, size = 0x8, scoped, tag = 'scoped memory for tpu_custom_call.1']
    #allocation4 [shape = 's32[2]{0}', space=sflag, size = 0x8, scoped, tag = 'scoped memory for tpu_custom_call.1']
    #allocation5 [shape = 'u8[262144]{0}', space=vmem, size = 0x40000, scoped, tag = 'input window, operand 1, single buffered']
    #allocation6 [shape = 's32[1]{0}', space=sflag, size = 0x4, scoped, tag = 'scoped memory for tpu_custom_call.1']
    #allocation7 [shape = 'u8[262144]{0}', space=vmem, size = 0x40000, scoped, tag = 'output window, operand 0']
    %8 = vsyncpa [#allocation3], 0
    %s9 = scalar_lea.sflag [#allocation3], 1
    %10 = vsyncpa %s9, 0
    %11 = vsyncpa [#allocation6], 0
    %12 = vsyncpa [#allocation4], 0
    %s13 = scalar_lea.sflag [#allocation4], 1
    %14 = vsyncpa %s13, 0
    loop: start=0, step=1, limit=4
    $region2: #{tpu_custom_call.1} parent=1 // loop_pre_header
      _
    $region3: #{tpu_custom_call.1} parent=1 // loop_header
      %s16 = sphi 0, %s20
      %p17 = scmp.ge.s32.totalorder %s16, 4
      %s23 = sphi 0, %s35
      %s24 = sphi 0, %s31
      %s25 = sphi 0, %s23
      %s26 = sphi 0, %s24
      %s27 = sphi 0, %s25
      %s28 = sphi 0, %s26
      %s38 = sphi 0, %s40
      %s41 = sphi 0, %s38
      %s42 = sphi 0, %s41
      %s58 = sphi 0, %s42
      %s64 = sphi 0, %s66
      %s67 = sphi 0, %s64
      %s68 = sphi 0, %s67
      %s84 = sphi 0, %s68
      %s90 = sphi 0, %s92
      %s93 = sphi 0, %s90
      %s94 = sphi 0, %s93
      %s110 = sphi 0, %s94
      %s118 = sphi 0, %s120
      %s121 = sphi 0, %s118
      %s122 = sphi 0, %s121
      %s138 = sphi 0, %s122
    $region4: #{tpu_custom_call.1} parent=1 // loop_header_branch
      %19 = sbr.rel (%p17) target = $region8
    $region5: #{tpu_custom_call.1} parent=1 // loop_body
      %s21 = ssub.s32 %s16, 1
      %s22 = ssub.s32 %s16, 2
      %s29 = sadd.s32 1, %s24
      %p30 = scmp.ge.s32.totalorder %s29, 1
      %s31 = scalar_select %p30, 0, %s29
      %s32 = sadd.s32 1, %s23
      %s33 = scalar_select %p30, %s32, %s23
      %p34 = scmp.ge.s32.totalorder %s33, 2
      %s35 = scalar_select %p34, 0, %s33
      %s36 = ssub.s32 %s23, %s35
      %p37 = scmp.eq.s32.totalorder %s36, 0
      %s39 = sadd.s32 %s38, 1
      %s40 = scalar_select %p37, %s38, %s39
      %p43 = pneg %p37
      %p44 = scmp.eq.s32.totalorder %s16, 1
      %p45 = por %p43, %p44
      %p46 = scmp.ne.s32.totalorder %s38, %s41
      %p47 = scmp.eq.s32.totalorder %s16, 0
      %p48 = por %p46, %p47
      %p49 = scmp.ne.s32.totalorder %s38, %s41
      %p50 = scmp.eq.s32.totalorder %s21, 1
      %p51 = por %p49, %p50
      %p52 = scmp.ne.s32.totalorder %s41, %s42
      %p53 = scmp.eq.s32.totalorder %s21, 0
      %p54 = por %p52, %p53
      %p55 = scmp.ne.s32.totalorder %s41, %s42
      %p56 = scmp.eq.s32.totalorder %s22, 1
      %p57 = por %p55, %p56
      %p59 = scmp.ne.s32.totalorder %s42, %s58
      %p60 = scmp.eq.s32.totalorder %s22, 0
      %p61 = por %p59, %p60
      %s62 = ssub.s32 %s24, %s31
      %p63 = scmp.eq.s32.totalorder %s62, 0
      %s65 = sadd.s32 %s64, 1
      %s66 = scalar_select %p63, %s64, %s65
      %p69 = pneg %p63
      %p70 = scmp.eq.s32.totalorder %s16, 1
      %p71 = por %p69, %p70
      %p72 = scmp.ne.s32.totalorder %s64, %s67
      %p73 = scmp.eq.s32.totalorder %s16, 0
      %p74 = por %p72, %p73
      %p75 = scmp.ne.s32.totalorder %s64, %s67
      %p76 = scmp.eq.s32.totalorder %s21, 1
      %p77 = por %p75, %p76
      %p78 = scmp.ne.s32.totalorder %s67, %s68
      %p79 = scmp.eq.s32.totalorder %s21, 0
      %p80 = por %p78, %p79
      %p81 = scmp.ne.s32.totalorder %s67, %s68
      %p82 = scmp.eq.s32.totalorder %s22, 1
      %p83 = por %p81, %p82
      %p85 = scmp.ne.s32.totalorder %s68, %s84
      %p86 = scmp.eq.s32.totalorder %s22, 0
      %p87 = por %p85, %p86
      %s88 = ssub.s32 %s24, %s31
      %p89 = scmp.eq.s32.totalorder %s88, 0
      %s91 = sadd.s32 %s90, 1
      %s92 = scalar_select %p89, %s90, %s91
      %p95 = pneg %p89
      %p96 = scmp.eq.s32.totalorder %s16, 1
      %p97 = por %p95, %p96
      %p98 = scmp.ne.s32.totalorder %s90, %s93
      %p99 = scmp.eq.s32.totalorder %s16, 0
      %p100 = por %p98, %p99
      %p101 = scmp.ne.s32.totalorder %s90, %s93
      %p102 = scmp.eq.s32.totalorder %s21, 1
      %p103 = por %p101, %p102
      %p104 = scmp.ne.s32.totalorder %s93, %s94
      %p105 = scmp.eq.s32.totalorder %s21, 0
      %p106 = por %p104, %p105
      %p107 = scmp.ne.s32.totalorder %s93, %s94
      %p108 = scmp.eq.s32.totalorder %s22, 1
      %p109 = por %p107, %p108
      %p111 = scmp.ne.s32.totalorder %s94, %s110
      %p112 = scmp.eq.s32.totalorder %s22, 0
      %p113 = por %p111, %p112
      %s114 = ssub.s32 %s23, %s35
      %s115 = ssub.s32 %s24, %s31
      %s116 = sor.u32 %s114, %s115
      %p117 = scmp.eq.s32.totalorder %s116, 0
      %s119 = sadd.s32 %s118, 1
      %s120 = scalar_select %p117, %s118, %s119
      %p123 = pneg %p117
      %p124 = scmp.eq.s32.totalorder %s16, 1
      %p125 = por %p123, %p124
      %p126 = scmp.ne.s32.totalorder %s118, %s121
      %p127 = scmp.eq.s32.totalorder %s16, 0
      %p128 = por %p126, %p127
      %p129 = scmp.ne.s32.totalorder %s118, %s121
      %p130 = scmp.eq.s32.totalorder %s21, 1
      %p131 = por %p129, %p130
      %p132 = scmp.ne.s32.totalorder %s121, %s122
      %p133 = scmp.eq.s32.totalorder %s21, 0
      %p134 = por %p132, %p133
      %p135 = scmp.ne.s32.totalorder %s121, %s122
      %p136 = scmp.eq.s32.totalorder %s22, 1
      %p137 = por %p135, %p136
      %p139 = scmp.ne.s32.totalorder %s122, %s138
      %p140 = scmp.eq.s32.totalorder %s22, 0
      %p141 = por %p139, %p140
      %p142 = scmp.le.s32.totalorder 1, %s16
      %p143 = scmp.lt.s32.totalorder %s16, 3
      %p144 = pnand %p142, %p143
      %p145 = pneg %p144
      // Predicated region
      $region9: #{tpu_custom_call.1} parent=5 // pred_check
        _
      $region10: #{tpu_custom_call.1} parent=5 // pred_check_branch
        %147 = sbr.rel (%p144) target = $region12
      $region11: #{tpu_custom_call.1} parent=5 // pred_region
        %s148 = ssub.s32 %s16, 1
        // Predicated region
        $region13: #{tpu_custom_call.1} parent=11 // pred_check
          %p149 = pneg %p80
        $region14: #{tpu_custom_call.1} parent=11 // pred_check_branch
          %151 = sbr.rel (%p149) target = $region16
        $region15: #{tpu_custom_call.1} parent=11 // pred_region
          %s152 = smul.u32 2, %s26
          %s154 = ssub.s32 8192, 8192
          %155 = vsyncadd [#allocation6], %s154
          %s156 = smul.addr %s152, 128
          %s157 = scalar_lea.hbm %s1, %s156
          %s158 = sshll.u32 [#allocation5], 4
          %s159 = int_to_ptr.vmem [resolvable:$true] %s158
          %164 = dma.hbm_to_vmem [thread:$0]  %s157, 8192, %s159, [#allocation6], 256, 256, 16
        $region16: #{tpu_custom_call.1} parent=11 // pred_fallthru
          _
        // Predicated region
        $region17: #{tpu_custom_call.1} parent=11 // pred_check
          %p165 = pneg %p106
        $region18: #{tpu_custom_call.1} parent=11 // pred_check_branch
          %167 = sbr.rel (%p165) target = $region20
        $region19: #{tpu_custom_call.1} parent=11 // pred_region
          %s168 = smul.u32 2, %s26
          %p169 = scmp.lt.s32.totalorder %s168, 1
          %s170 = scalar_select %p169, %s168, 1
          %s171 = scalar_lea.vmem %s2, %s170
          %s172 = smul.u32 2, %s26
        $region20: #{tpu_custom_call.1} parent=11 // pred_fallthru
          _
      $region12: #{tpu_custom_call.1} parent=5 // pred_fallthru
        _
      %p173 = scmp.lt.s32.totalorder %s16, 2
      // Predicated region
      $region21: #{tpu_custom_call.1} parent=5 // pred_check
        %p174 = pneg %p173
      $region22: #{tpu_custom_call.1} parent=5 // pred_check_branch
        %176 = sbr.rel (%p174) target = $region24
      $region23: #{tpu_custom_call.1} parent=5 // pred_region
        // Predicated region
        $region25: #{tpu_custom_call.1} parent=23 // pred_check
          %p177 = pneg %p48
        $region26: #{tpu_custom_call.1} parent=23 // pred_check_branch
          %179 = sbr.rel (%p177) target = $region28
        $region27: #{tpu_custom_call.1} parent=23 // pred_region
          %s180 = sand.u32 %s38, 1
          %s181 = scalar_lea.sflag [#allocation3], %s180
          %s182 = sand.u32 %s38, 1
          %s183 = smul.addr %s182, 256
          %s184 = scalar_lea.vmem [#allocation2], %s183
          %s185 = smul.u32 16, %s23
          %s187 = ssub.s32 4096, 4096
          %188 = vsyncadd %s181, %s187
          %s189 = smul.addr %s185, 2
          %s190 = smul.addr %s189, 128
          %s191 = scalar_lea.hbm %s0, %s190
          %s192 = sshll.u32 %s184, 4
          %s193 = int_to_ptr.vmem [resolvable:$true] %s192
          %198 = dma.hbm_to_vmem [thread:$0]  %s191, 4096, %s193, %s181, 256, 256, 16
        $region28: #{tpu_custom_call.1} parent=23 // pred_fallthru
          _
      $region24: #{tpu_custom_call.1} parent=5 // pred_fallthru
        _
      %p199 = scmp.le.s32.totalorder 1, %s16
      %p200 = scmp.lt.s32.totalorder %s16, 3
      %p201 = pnand %p199, %p200
      %p202 = pneg %p201
      // Predicated region
      $region29: #{tpu_custom_call.1} parent=5 // pred_check
        _
      $region30: #{tpu_custom_call.1} parent=5 // pred_check_branch
        %204 = sbr.rel (%p201) target = $region32
      $region31: #{tpu_custom_call.1} parent=5 // pred_region
        %s205 = ssub.s32 %s16, 1
        %s206 = sand.u32 %s41, 1
        %s207 = scalar_lea.sflag [#allocation3], %s206
        %s208 = sand.u32 %s41, 1
        %s209 = smul.addr %s208, 256
        %s210 = scalar_lea.vmem [#allocation2], %s209
        // Predicated region
        $region33: #{tpu_custom_call.1} parent=31 // pred_check
          %p211 = pneg %p54
        $region34: #{tpu_custom_call.1} parent=31 // pred_check_branch
          %213 = sbr.rel (%p211) target = $region36
        $region35: #{tpu_custom_call.1} parent=31 // pred_region
          %214 = dma.done %s207, 4096
        $region36: #{tpu_custom_call.1} parent=31 // pred_fallthru
          _
        // Predicated region
        $region37: #{tpu_custom_call.1} parent=31 // pred_check
          %p215 = pneg %p80
        $region38: #{tpu_custom_call.1} parent=31 // pred_check_branch
          %217 = sbr.rel (%p215) target = $region40
        $region39: #{tpu_custom_call.1} parent=31 // pred_region
          %218 = dma.done [#allocation6], 8192
        $region40: #{tpu_custom_call.1} parent=31 // pred_fallthru
          _
        %s219 = sand.u32 %s41, 1
        %s220 = scalar_lea.sflag [#allocation3], %s219
        %s221 = sand.u32 %s41, 1
        %s222 = smul.addr %s221, 256
        %s223 = scalar_lea.vmem [#allocation2], %s222
        %p224 = pneg %p54
        %p225 = pneg %p51
        %p226 = pneg %p80
        %p227 = pneg %p77
        %s228 = smul.u32 2, %s26
        %p229 = scmp.lt.s32.totalorder %s228, 1
        %s230 = scalar_select %p229, %s228, 1
        %s231 = scalar_lea.vmem %s2, %s230
        %p232 = pneg %p106
        %p233 = pneg %p103
        %p234 = pneg %p134
        %p235 = pneg %p131
        %s236 = sand.u32 %s121, 1
        %s237 = scalar_lea.sflag [#allocation4], %s236
        %s238 = sand.u32 %s121, 1
        %s239 = smul.addr %s238, 256
        %s240 = scalar_lea.vmem [#allocation7], %s239
        %s241 = smul.u32 16, %s25
        %s242 = smul.u32 2, %s26
        %s243 = smul.u32 2, %s26
        %p244 = scmp.lt.s32.totalorder %s243, 1
        %s245 = scalar_select %p244, %s243, 1
        %s246 = scalar_lea.vmem %s2, %s245
        %s247 = smul.u32 2, %s26
        %s248 = smul.u32 16, %s25
        %s249 = smul.u32 2, %s26
        %v250 = vld [vmem:[%s210] sm:$0xff]
        %v251 = vld [vmem:[%s210 + $0x8] sm:$0xff]
        %v252 = vld [vmem:[%s210 + $0x10] sm:$0xff]
        %v253 = vld [vmem:[%s210 + $0x18] sm:$0xff]
        %v254 = vld [vmem:[%s210 + $0x20] sm:$0xff]
        %v255 = vld [vmem:[%s210 + $0x28] sm:$0xff]
        %v256 = vld [vmem:[%s210 + $0x30] sm:$0xff]
        %v257 = vld [vmem:[%s210 + $0x38] sm:$0xff]
        %v258 = vld [vmem:[%s210 + $0x40] sm:$0xff]
        %v259 = vld [vmem:[%s210 + $0x48] sm:$0xff]
        %v260 = vld [vmem:[%s210 + $0x50] sm:$0xff]
        %v261 = vld [vmem:[%s210 + $0x58] sm:$0xff]
        %v262 = vld [vmem:[%s210 + $0x60] sm:$0xff]
        %v263 = vld [vmem:[%s210 + $0x68] sm:$0xff]
        %v264 = vld [vmem:[%s210 + $0x70] sm:$0xff]
        %v265 = vld [vmem:[%s210 + $0x78] sm:$0xff]
        %v266 = vld [vmem:[%s210 + $0x80] sm:$0xff]
        %v267 = vld [vmem:[%s210 + $0x88] sm:$0xff]
        %v268 = vld [vmem:[%s210 + $0x90] sm:$0xff]
        %v269 = vld [vmem:[%s210 + $0x98] sm:$0xff]
        %v270 = vld [vmem:[%s210 + $0xa0] sm:$0xff]
        %v271 = vld [vmem:[%s210 + $0xa8] sm:$0xff]
        %v272 = vld [vmem:[%s210 + $0xb0] sm:$0xff]
        %v273 = vld [vmem:[%s210 + $0xb8] sm:$0xff]
        %v274 = vld [vmem:[%s210 + $0xc0] sm:$0xff]
        %v275 = vld [vmem:[%s210 + $0xc8] sm:$0xff]
        %v276 = vld [vmem:[%s210 + $0xd0] sm:$0xff]
        %v277 = vld [vmem:[%s210 + $0xd8] sm:$0xff]
        %v278 = vld [vmem:[%s210 + $0xe0] sm:$0xff]
        %v279 = vld [vmem:[%s210 + $0xe8] sm:$0xff]
        %v280 = vld [vmem:[%s210 + $0xf0] sm:$0xff]
        %v281 = vld [vmem:[%s210 + $0xf8] sm:$0xff]
        %v282 = vld [vmem:[#allocation5] sm:$0xff]
        %v283 = vld [vmem:[#allocation5 + $0x8] sm:$0xff]
        %v284 = vld [vmem:[#allocation5 + $0x10] sm:$0xff]
        %v285 = vld [vmem:[#allocation5 + $0x18] sm:$0xff]
        %v286 = vld [vmem:[#allocation5 + $0x20] sm:$0xff]
        %v287 = vld [vmem:[#allocation5 + $0x28] sm:$0xff]
        %v288 = vld [vmem:[#allocation5 + $0x30] sm:$0xff]
        %v289 = vld [vmem:[#allocation5 + $0x38] sm:$0xff]
        %v290 = vld [vmem:[#allocation5 + $0x40] sm:$0xff]
        %v291 = vld [vmem:[#allocation5 + $0x48] sm:$0xff]
        %v292 = vld [vmem:[#allocation5 + $0x50] sm:$0xff]
        %v293 = vld [vmem:[#allocation5 + $0x58] sm:$0xff]
        %v294 = vld [vmem:[#allocation5 + $0x60] sm:$0xff]
        %v295 = vld [vmem:[#allocation5 + $0x68] sm:$0xff]
        %v296 = vld [vmem:[#allocation5 + $0x70] sm:$0xff]
        %v297 = vld [vmem:[#allocation5 + $0x78] sm:$0xff]
        %v298 = vld [vmem:[#allocation5 + $0x80] sm:$0xff]
        %v299 = vld [vmem:[#allocation5 + $0x88] sm:$0xff]
        %v300 = vld [vmem:[#allocation5 + $0x90] sm:$0xff]
        %v301 = vld [vmem:[#allocation5 + $0x98] sm:$0xff]
        %v302 = vld [vmem:[#allocation5 + $0xa0] sm:$0xff]
        %v303 = vld [vmem:[#allocation5 + $0xa8] sm:$0xff]
        %v304 = vld [vmem:[#allocation5 + $0xb0] sm:$0xff]
        %v305 = vld [vmem:[#allocation5 + $0xb8] sm:$0xff]
        %v306 = vld [vmem:[#allocation5 + $0xc0] sm:$0xff]
        %v307 = vld [vmem:[#allocation5 + $0xc8] sm:$0xff]
        %v308 = vld [vmem:[#allocation5 + $0xd0] sm:$0xff]
        %v309 = vld [vmem:[#allocation5 + $0xd8] sm:$0xff]
        %v310 = vld [vmem:[#allocation5 + $0xe0] sm:$0xff]
        %v311 = vld [vmem:[#allocation5 + $0xe8] sm:$0xff]
        %v312 = vld [vmem:[#allocation5 + $0xf0] sm:$0xff]
        %v313 = vld [vmem:[#allocation5 + $0xf8] sm:$0xff]
        %v314 = vld [vmem:[#allocation5 + $0x100] sm:$0xff]
        %v315 = vld [vmem:[#allocation5 + $0x108] sm:$0xff]
        %v316 = vld [vmem:[#allocation5 + $0x110] sm:$0xff]
        %v317 = vld [vmem:[#allocation5 + $0x118] sm:$0xff]
        %v318 = vld [vmem:[#allocation5 + $0x120] sm:$0xff]
        %v319 = vld [vmem:[#allocation5 + $0x128] sm:$0xff]
        %v320 = vld [vmem:[#allocation5 + $0x130] sm:$0xff]
        %v321 = vld [vmem:[#allocation5 + $0x138] sm:$0xff]
        %v322 = vld [vmem:[#allocation5 + $0x140] sm:$0xff]
        %v323 = vld [vmem:[#allocation5 + $0x148] sm:$0xff]
        %v324 = vld [vmem:[#allocation5 + $0x150] sm:$0xff]
        %v325 = vld [vmem:[#allocation5 + $0x158] sm:$0xff]
        %v326 = vld [vmem:[#allocation5 + $0x160] sm:$0xff]
        %v327 = vld [vmem:[#allocation5 + $0x168] sm:$0xff]
        %v328 = vld [vmem:[#allocation5 + $0x170] sm:$0xff]
        %v329 = vld [vmem:[#allocation5 + $0x178] sm:$0xff]
        %v330 = vld [vmem:[#allocation5 + $0x180] sm:$0xff]
        %v331 = vld [vmem:[#allocation5 + $0x188] sm:$0xff]
        %v332 = vld [vmem:[#allocation5 + $0x190] sm:$0xff]
        %v333 = vld [vmem:[#allocation5 + $0x198] sm:$0xff]
        %v334 = vld [vmem:[#allocation5 + $0x1a0] sm:$0xff]
        %v335 = vld [vmem:[#allocation5 + $0x1a8] sm:$0xff]
        %v336 = vld [vmem:[#allocation5 + $0x1b0] sm:$0xff]
        %v337 = vld [vmem:[#allocation5 + $0x1b8] sm:$0xff]
        %v338 = vld [vmem:[#allocation5 + $0x1c0] sm:$0xff]
        %v339 = vld [vmem:[#allocation5 + $0x1c8] sm:$0xff]
        %v340 = vld [vmem:[#allocation5 + $0x1d0] sm:$0xff]
        %v341 = vld [vmem:[#allocation5 + $0x1d8] sm:$0xff]
        %v342 = vld [vmem:[#allocation5 + $0x1e0] sm:$0xff]
        %v343 = vld [vmem:[#allocation5 + $0x1e8] sm:$0xff]
        %v344 = vld [vmem:[#allocation5 + $0x1f0] sm:$0xff]
        %v345 = vld [vmem:[#allocation5 + $0x1f8] sm:$0xff]
        %v346 = vld [vmem:[%s246] sm:$0x3]
        %v348 = vlaneseq
        %v349 = vshrl.u32 %v348, 7
        %v350 = vsub.s32 0, %v349
        %v351 = vrot.slane %v346, %v350
        %v352 = vlaneseq
        %v353 = vshrl.u32 %v352, 7
        %v354 = vsub.s32 1, %v353
        %v355 = vrot.slane %v346, %v354
        %358 = vmatprep.subr.mxu0 %v283
        %359 = vmatpush1.msra.mxu0 %v282
        %360 = vmatprep.subr.mxu0 %v285
        %361 = vmatpush1.msra.mxu0 %v284
        %362 = vmatprep.subr.mxu0 %v287
        %363 = vmatpush1.msra.mxu0 %v286
        %364 = vmatprep.subr.mxu0 %v289
        %365 = vmatpush1.msra.mxu0 %v288
        %366 = vmatprep.subr.mxu0 %v291
        %367 = vmatpush1.msra.mxu0 %v290
        %368 = vmatprep.subr.mxu0 %v293
        %369 = vmatpush1.msra.mxu0 %v292
        %370 = vmatprep.subr.mxu0 %v295
        %371 = vmatpush1.msra.mxu0 %v294
        %372 = vmatprep.subr.mxu0 %v297
        %373 = vmatpush1.msra.mxu0 %v296
        %374 = vmatprep.subr.mxu0 %v299
        %375 = vmatpush1.msra.mxu0 %v298
        %376 = vmatprep.subr.mxu0 %v301
        %377 = vmatpush1.msra.mxu0 %v300
        %378 = vmatprep.subr.mxu0 %v303
        %379 = vmatpush1.msra.mxu0 %v302
        %380 = vmatprep.subr.mxu0 %v305
        %381 = vmatpush1.msra.mxu0 %v304
        %382 = vmatprep.subr.mxu0 %v307
        %383 = vmatpush1.msra.mxu0 %v306
        %384 = vmatprep.subr.mxu0 %v309
        %385 = vmatpush1.msra.mxu0 %v308
        %386 = vmatprep.subr.mxu0 %v311
        %387 = vmatpush1.msra.mxu0 %v310
        %388 = vmatprep.subr.mxu0 %v313
        %389 = vmatpush1.msra.mxu0 %v312
        %390 = vmatprep.subr.mxu0 %v315
        %391 = vmatpush1.msra.mxu0 %v314
        %392 = vmatprep.subr.mxu0 %v317
        %393 = vmatpush1.msra.mxu0 %v316
        %394 = vmatprep.subr.mxu0 %v319
        %395 = vmatpush1.msra.mxu0 %v318
        %396 = vmatprep.subr.mxu0 %v321
        %397 = vmatpush1.msra.mxu0 %v320
        %398 = vmatprep.subr.mxu0 %v323
        %399 = vmatpush1.msra.mxu0 %v322
        %400 = vmatprep.subr.mxu0 %v325
        %401 = vmatpush1.msra.mxu0 %v324
        %402 = vmatprep.subr.mxu0 %v327
        %403 = vmatpush1.msra.mxu0 %v326
        %404 = vmatprep.subr.mxu0 %v329
        %405 = vmatpush1.msra.mxu0 %v328
        %406 = vmatprep.subr.mxu0 %v331
        %407 = vmatpush1.msra.mxu0 %v330
        %408 = vmatprep.subr.mxu0 %v333
        %409 = vmatpush1.msra.mxu0 %v332
        %410 = vmatprep.subr.mxu0 %v335
        %411 = vmatpush1.msra.mxu0 %v334
        %412 = vmatprep.subr.mxu0 %v337
        %413 = vmatpush1.msra.mxu0 %v336
        %414 = vmatprep.subr.mxu0 %v339
        %415 = vmatpush1.msra.mxu0 %v338
        %416 = vmatprep.subr.mxu0 %v341
        %417 = vmatpush1.msra.mxu0 %v340
        %418 = vmatprep.subr.mxu0 %v343
        %419 = vmatpush1.msra.mxu0 %v342
        %420 = vmatprep.subr.mxu0 %v345
        %421 = vmatpush1.msra.mxu0 %v344
        %422 = vmatprep.mubr.f32.mxu0 %v251
        %423 = vmatmul.mubr.f32.gmra.mrb[0].mxu0 %v250
        %v424 = vpop.f32.mrb[0].mxu0
        %v425 = vadd.f32 %v351, %v424
        %v426 = vpop.f32.mrb[0].mxu0
        %v427 = vadd.f32 %v355, %v426
        %428 = vmatprep.mubr.f32.mxu0 %v253
        %429 = vmatmul.mubr.f32.gmra.mrb[0].mxu0 %v252
        %v430 = vpop.f32.mrb[0].mxu0
        %v431 = vadd.f32 %v351, %v430
        %v432 = vpop.f32.mrb[0].mxu0
        %v433 = vadd.f32 %v355, %v432
        %434 = vmatprep.mubr.f32.mxu0 %v255
        %435 = vmatmul.mubr.f32.gmra.mrb[0].mxu0 %v254
        %v436 = vpop.f32.mrb[0].mxu0
        %v437 = vadd.f32 %v351, %v436
        %v438 = vpop.f32.mrb[0].mxu0
        %v439 = vadd.f32 %v355, %v438
        %440 = vmatprep.mubr.f32.mxu0 %v257
        %441 = vmatmul.mubr.f32.gmra.mrb[0].mxu0 %v256
        %v442 = vpop.f32.mrb[0].mxu0
        %v443 = vadd.f32 %v351, %v442
        %v444 = vpop.f32.mrb[0].mxu0
        %v445 = vadd.f32 %v355, %v444
        %446 = vmatprep.mubr.f32.mxu0 %v259
        %447 = vmatmul.mubr.f32.gmra.mrb[0].mxu0 %v258
        %v448 = vpop.f32.mrb[0].mxu0
        %v449 = vadd.f32 %v351, %v448
        %v450 = vpop.f32.mrb[0].mxu0
        %v451 = vadd.f32 %v355, %v450
        %452 = vmatprep.mubr.f32.mxu0 %v261
        %453 = vmatmul.mubr.f32.gmra.mrb[0].mxu0 %v260
        %v454 = vpop.f32.mrb[0].mxu0
        %v455 = vadd.f32 %v351, %v454
        %v456 = vpop.f32.mrb[0].mxu0
        %v457 = vadd.f32 %v355, %v456
        %458 = vmatprep.mubr.f32.mxu0 %v263
        %459 = vmatmul.mubr.f32.gmra.mrb[0].mxu0 %v262
        %v460 = vpop.f32.mrb[0].mxu0
        %v461 = vadd.f32 %v351, %v460
        %v462 = vpop.f32.mrb[0].mxu0
        %v463 = vadd.f32 %v355, %v462
        %464 = vmatprep.mubr.f32.mxu0 %v265
        %465 = vmatmul.mubr.f32.gmra.mrb[0].mxu0 %v264
        %v466 = vpop.f32.mrb[0].mxu0
        %v467 = vadd.f32 %v351, %v466
        %v468 = vpop.f32.mrb[0].mxu0
        %v469 = vadd.f32 %v355, %v468
        %470 = vmatprep.mubr.f32.mxu0 %v267
        %471 = vmatmul.mubr.f32.gmra.mrb[0].mxu0 %v266
        %v472 = vpop.f32.mrb[0].mxu0
        %v473 = vadd.f32 %v351, %v472
        %v474 = vpop.f32.mrb[0].mxu0
        %v475 = vadd.f32 %v355, %v474
        %476 = vmatprep.mubr.f32.mxu0 %v269
        %477 = vmatmul.mubr.f32.gmra.mrb[0].mxu0 %v268
        %v478 = vpop.f32.mrb[0].mxu0
        %v479 = vadd.f32 %v351, %v478
        %v480 = vpop.f32.mrb[0].mxu0
        %v481 = vadd.f32 %v355, %v480
        %482 = vmatprep.mubr.f32.mxu0 %v271
        %483 = vmatmul.mubr.f32.gmra.mrb[0].mxu0 %v270
        %v484 = vpop.f32.mrb[0].mxu0
        %v485 = vadd.f32 %v351, %v484
        %v486 = vpop.f32.mrb[0].mxu0
        %v487 = vadd.f32 %v355, %v486
        %488 = vmatprep.mubr.f32.mxu0 %v273
        %489 = vmatmul.mubr.f32.gmra.mrb[0].mxu0 %v272
        %v490 = vpop.f32.mrb[0].mxu0
        %v491 = vadd.f32 %v351, %v490
        %v492 = vpop.f32.mrb[0].mxu0
        %v493 = vadd.f32 %v355, %v492
        %494 = vmatprep.mubr.f32.mxu0 %v275
        %495 = vmatmul.mubr.f32.gmra.mrb[0].mxu0 %v274
        %v496 = vpop.f32.mrb[0].mxu0
        %v497 = vadd.f32 %v351, %v496
        %v498 = vpop.f32.mrb[0].mxu0
        %v499 = vadd.f32 %v355, %v498
        %500 = vmatprep.mubr.f32.mxu0 %v277
        %501 = vmatmul.mubr.f32.gmra.mrb[0].mxu0 %v276
        %v502 = vpop.f32.mrb[0].mxu0
        %v503 = vadd.f32 %v351, %v502
        %v504 = vpop.f32.mrb[0].mxu0
        %v505 = vadd.f32 %v355, %v504
        %506 = vmatprep.mubr.f32.mxu0 %v279
        %507 = vmatmul.mubr.f32.gmra.mrb[0].mxu0 %v278
        %v508 = vpop.f32.mrb[0].mxu0
        %v509 = vadd.f32 %v351, %v508
        %v510 = vpop.f32.mrb[0].mxu0
        %v511 = vadd.f32 %v355, %v510
        %512 = vmatprep.mubr.f32.mxu0 %v281
        %513 = vmatmul.mubr.f32.gmra.mrb[0].mxu0 %v280
        %v514 = vpop.f32.mrb[0].mxu0
        %v515 = vadd.f32 %v351, %v514
        %v516 = vpop.f32.mrb[0].mxu0
        %v517 = vadd.f32 %v355, %v516
        %518 = vdwg.mxu0
        %519 = vst [vmem:[%s240] sm:$0xff] %v425
        %520 = vst [vmem:[%s240 + $0x8] sm:$0xff] %v427
        %521 = vst [vmem:[%s240 + $0x10] sm:$0xff] %v431
        %522 = vst [vmem:[%s240 + $0x18] sm:$0xff] %v433
        %523 = vst [vmem:[%s240 + $0x20] sm:$0xff] %v437
        %524 = vst [vmem:[%s240 + $0x28] sm:$0xff] %v439
        %525 = vst [vmem:[%s240 + $0x30] sm:$0xff] %v443
        %526 = vst [vmem:[%s240 + $0x38] sm:$0xff] %v445
        %527 = vst [vmem:[%s240 + $0x40] sm:$0xff] %v449
        %528 = vst [vmem:[%s240 + $0x48] sm:$0xff] %v451
        %529 = vst [vmem:[%s240 + $0x50] sm:$0xff] %v455
        %530 = vst [vmem:[%s240 + $0x58] sm:$0xff] %v457
        %531 = vst [vmem:[%s240 + $0x60] sm:$0xff] %v461
        %532 = vst [vmem:[%s240 + $0x68] sm:$0xff] %v463
        %533 = vst [vmem:[%s240 + $0x70] sm:$0xff] %v467
        %534 = vst [vmem:[%s240 + $0x78] sm:$0xff] %v469
        %535 = vst [vmem:[%s240 + $0x80] sm:$0xff] %v473
        %536 = vst [vmem:[%s240 + $0x88] sm:$0xff] %v475
        %537 = vst [vmem:[%s240 + $0x90] sm:$0xff] %v479
        %538 = vst [vmem:[%s240 + $0x98] sm:$0xff] %v481
        %539 = vst [vmem:[%s240 + $0xa0] sm:$0xff] %v485
        %540 = vst [vmem:[%s240 + $0xa8] sm:$0xff] %v487
        %541 = vst [vmem:[%s240 + $0xb0] sm:$0xff] %v491
        %542 = vst [vmem:[%s240 + $0xb8] sm:$0xff] %v493
        %543 = vst [vmem:[%s240 + $0xc0] sm:$0xff] %v497
        %544 = vst [vmem:[%s240 + $0xc8] sm:$0xff] %v499
        %545 = vst [vmem:[%s240 + $0xd0] sm:$0xff] %v503
        %546 = vst [vmem:[%s240 + $0xd8] sm:$0xff] %v505
        %547 = vst [vmem:[%s240 + $0xe0] sm:$0xff] %v509
        %548 = vst [vmem:[%s240 + $0xe8] sm:$0xff] %v511
        %549 = vst [vmem:[%s240 + $0xf0] sm:$0xff] %v515
        %550 = vst [vmem:[%s240 + $0xf8] sm:$0xff] %v517
        %s551 = sand.u32 %s121, 1
        %s552 = scalar_lea.sflag [#allocation4], %s551
        %s553 = sand.u32 %s121, 1
        %s554 = smul.addr %s553, 256
        %s555 = scalar_lea.vmem [#allocation7], %s554
        // Predicated region
        $region41: #{tpu_custom_call.1} parent=31 // pred_check
          %p556 = pneg %p131
        $region42: #{tpu_custom_call.1} parent=31 // pred_check_branch
          %558 = sbr.rel (%p556) target = $region44
        $region43: #{tpu_custom_call.1} parent=31 // pred_region
          %s559 = smul.u32 16, %s25
          %s560 = smul.u32 2, %s26
          %s562 = ssub.s32 4096, 4096
          %563 = vsyncadd %s552, %s562
          %s564 = smul.addr %s559, 2
          %s565 = sadd.s32 %s560, %s564
          %s566 = smul.addr %s565, 128
          %s567 = scalar_lea.hbm %s3, %s566
          %s568 = sshll.u32 %s555, 4
          %s569 = int_to_ptr.vmem [resolvable:$true] %s568
          %574 = dma.vmem_to_hbm [thread:$0]  %s569, 4096, %s567, %s552, 256, 256, 16
        $region44: #{tpu_custom_call.1} parent=31 // pred_fallthru
          _
      $region32: #{tpu_custom_call.1} parent=5 // pred_fallthru
        _
      %p575 = scmp.le.s32.totalorder 2, %s16
      // Predicated region
      $region45: #{tpu_custom_call.1} parent=5 // pred_check
        %p576 = pneg %p575
      $region46: #{tpu_custom_call.1} parent=5 // pred_check_branch
        %578 = sbr.rel (%p576) target = $region48
      $region47: #{tpu_custom_call.1} parent=5 // pred_region
        %s579 = ssub.s32 %s16, 2
        // Predicated region
        $region49: #{tpu_custom_call.1} parent=47 // pred_check
          %p580 = pneg %p137
        $region50: #{tpu_custom_call.1} parent=47 // pred_check_branch
          %582 = sbr.rel (%p580) target = $region52
        $region51: #{tpu_custom_call.1} parent=47 // pred_region
          %s583 = sand.u32 %s122, 1
          %s584 = scalar_lea.sflag [#allocation4], %s583
          %s585 = sand.u32 %s122, 1
          %s586 = smul.addr %s585, 256
          %s587 = scalar_lea.vmem [#allocation7], %s586
          %588 = dma.done %s584, 4096
        $region52: #{tpu_custom_call.1} parent=47 // pred_fallthru
          _
      $region48: #{tpu_custom_call.1} parent=5 // pred_fallthru
        _
    $region6: #{tpu_custom_call.1} parent=1 // loop_footer
      %s20 = sadd.s32 1, %s16
    $region7: #{tpu_custom_call.1} parent=1 // loop_footer_branch
      %15 = sbr.rel target = $region3
    $region8: #{tpu_custom_call.1} parent=1 // loop_exit
      _
    %589 = vsyncpa [#allocation3], 1
    %s590 = scalar_lea.sflag [#allocation3], 1
    %591 = vsyncpa %s590, 1
    %592 = vsyncpa [#allocation6], 1
    %593 = vsyncpa [#allocation4], 1
    %s594 = scalar_lea.sflag [#allocation4], 1
    %595 = vsyncpa %s594, 1

</llo_original>
